<compile_context>
chip_gen: v7x
topology: tpu7x:2x2x1
jax: 0.10.0
libtpu: 0.0.40
codegen_flags: <defaults>
</compile_context>

<pallas_src>
import jax
import jax.numpy as jnp
from jax.experimental import pallas as pl
from jax.experimental.pallas import tpu as pltpu

NUM_HEADS = 10                            # number of Linear(6, 1) layers
FEAT_PER_HEAD = 6                         # input features per head
IN_FEATURES = NUM_HEADS * FEAT_PER_HEAD   # 60


def _round_up(n, m):
    return ((n + m - 1) // m) * m


def _pick_tile_and_vmem():
    """Per-generation batch tile and scoped-VMEM limit.

    Lane-padded, double-buffered footprint (f32 in + f32 out) is ~2 KiB/row:
      x  block: tile_b * 128 lanes * 4 B * 2 buffers
      out block: tile_b * 128 lanes * 4 B * 2 buffers
    """
    kind = ""
    try:
        kind = jax.devices()[0].device_kind.lower()
    except Exception:
        pass
    if "v7" in kind:
        # 3.2 TB/s HBM wants big tiles, but VMEM is only 64 MiB physical.
        # tile_b=16384 -> ~32 MiB of padded double buffers; cap scoped VMEM
        # at 48 MiB to leave headroom for compiler scratch.
        return 16384, 48 * 1024 * 1024
    if "v5" in kind:
        # v5e: 16 MiB default scoped VMEM, ~0.82 TB/s HBM.  tile_b=8192
        # (~16 MiB padded buffers) already sits >85% of roofline; raise the
        # scoped limit to 32 MiB so the double buffers + headroom fit.
        return 8192, 32 * 1024 * 1024
    # v6e / v4 etc.: 128 MiB VMEM, plenty of headroom for 16K-row tiles
    # (~32 MiB padded double buffers).
    return 16384, 64 * 1024 * 1024


def _net_kernel(x_ref, w_ref, b_ref, o_ref):
    # x_ref: [tile_b, 60] f32   (streamed over batch)
    # w_ref: [60, 10]     f32   (VMEM-resident block-diagonal weights)
    # b_ref: [1, 10]      f32   (VMEM-resident bias)
    # o_ref: [tile_b, 10] f32
    out = jnp.dot(
        x_ref[...],
        w_ref[...],
        preferred_element_type=jnp.float32,
        precision=jax.lax.Precision.HIGHEST,
    )
    o_ref[...] = out + b_ref[...]


def net_forward(x, w_packed, bias, *, tile_b=None):
    """x: [B, 60] f32, w_packed: [60, 10] f32, bias: [1, 10] f32 -> [B, 10] f32."""
    B = x.shape[0]

    default_tile_b, vmem_limit = _pick_tile_and_vmem()
    if tile_b is None:
        tile_b = default_tile_b

    # Never exceed the (sublane-rounded) batch itself.
    tile_b = min(tile_b, max(8, _round_up(B, 8)))
    # On large batches keep >= ~4 grid steps so the v7x megacore split and the
    # DMA/compute double-buffering stay active; never shrink below 2048 rows
    # (below that the ~0.35 us per-step overhead starts to dominate again).
    per_step = _round_up(pl.cdiv(B, 4), 8)
    if per_step >= 2048:
        tile_b = min(tile_b, per_step)

    grid = (pl.cdiv(B, tile_b),)

    return pl.pallas_call(
        _net_kernel,
        out_shape=jax.ShapeDtypeStruct((B, NUM_HEADS), jnp.float32),
        grid=grid,
        in_specs=[
            # x: streamed over the batch axis (double-buffered by Pallas).
            pl.BlockSpec((tile_b, IN_FEATURES), lambda i: (i, 0)),
            # weights / bias: constant block index -> loaded once, VMEM-resident.
            pl.BlockSpec((IN_FEATURES, NUM_HEADS), lambda i: (0, 0)),
            pl.BlockSpec((1, NUM_HEADS), lambda i: (0, 0)),
        ],
        out_specs=pl.BlockSpec((tile_b, NUM_HEADS), lambda i: (i, 0)),
        compiler_params=pltpu.CompilerParams(
            # Batch tiles are independent -> shard across v7x's two TensorCores.
            dimension_semantics=("parallel",),
            vmem_limit_bytes=vmem_limit,
        ),
    )(x, w_packed, bias)


def init_params(key):
    """Build the 10 Linear(6,1) layers (PyTorch-style U(-1/sqrt(6), 1/sqrt(6))
    init) and pack them into a block-diagonal [60, 10] weight + [1, 10] bias."""
    bound = 1.0 / jnp.sqrt(float(FEAT_PER_HEAD))
    kw, kb = jax.random.split(key)
    w_heads = jax.random.uniform(
        kw, (NUM_HEADS, FEAT_PER_HEAD), jnp.float32, -bound, bound)  # [10, 6]
    b_heads = jax.random.uniform(kb, (NUM_HEADS,), jnp.float32, -bound, bound)

    w_packed = jnp.zeros((IN_FEATURES, NUM_HEADS), jnp.float32)
    for i in range(NUM_HEADS):
        w_packed = w_packed.at[
            i * FEAT_PER_HEAD:(i + 1) * FEAT_PER_HEAD, i].set(w_heads[i])
    bias = b_heads.reshape(1, NUM_HEADS)
    return w_packed, bias, w_heads, b_heads


def reference_forward(x, w_heads, b_heads):
    """Plain-JAX f32 reference mirroring the PyTorch slice-wise loop."""
    cols = []
    for i in range(NUM_HEADS):
        xi = x[:, i * FEAT_PER_HEAD:(i + 1) * FEAT_PER_HEAD]       # [B, 6]
        cols.append(xi @ w_heads[i] + b_heads[i])                   # [B]
    return jnp.stack(cols, axis=1)                                  # [B, 10]


if __name__ == "__main__":
    key = jax.random.PRNGKey(0)
    k_x, k_p = jax.random.split(key)

    w_packed, bias, w_heads, b_heads = init_params(k_p)

    # Small smoke test (single tile), consistent with the module's [B, 60] input.
    B = 8
    x = jax.random.normal(k_x, (B, IN_FEATURES), jnp.float32)
    out = jax.block_until_ready(net_forward(x, w_packed, bias))
    ref = reference_forward(x, w_heads, b_heads)
    assert out.shape == (B, NUM_HEADS)
    # f32 end-to-end -> tight tolerance.
    assert jnp.allclose(out, ref, atol=1e-4, rtol=1e-4), "mismatch vs reference (B=8)"

    # Exercise the batch-tiled, multi-step grid path (parallel axis) as well.
    B2 = 64
    x2 = jax.random.normal(k_x, (B2, IN_FEATURES), jnp.float32)
    out2 = jax.block_until_ready(net_forward(x2, w_packed, bias, tile_b=16))
    ref2 = reference_forward(x2, w_heads, b_heads)
    assert out2.shape == (B2, NUM_HEADS)
    assert jnp.allclose(out2, ref2, atol=1e-4, rtol=1e-4), "mismatch vs reference (tiled)"

    print("KERNEL_OK")
</pallas_src>

<mosaic_0001>
module attributes {stable_mosaic.version = 11 : i64} {
  func.func @_net_kernel(%arg0: i32, %arg1: memref<8x60xf32, #tpu.memory_space<vmem>>, %arg2: memref<60x10xf32, #tpu.memory_space<vmem>>, %arg3: memref<1x10xf32, #tpu.memory_space<vmem>>, %arg4: memref<8x10xf32, #tpu.memory_space<vmem>>) attributes {dimension_semantics = [#tpu.dimension_semantics<parallel>], iteration_bounds = array<i64: 1>, scalar_prefetch = 0 : i64, scratch_operands = 0 : i64, tpu.core_type = #tpu.core_type<tc>, window_params = [{transform_indices = @transform_0, window_bounds = array<i64: 8, 60>}, {pipeline_mode = #tpu.pipeline_mode<synchronous>, transform_indices = @transform_1, window_bounds = array<i64: 60, 10>}, {pipeline_mode = #tpu.pipeline_mode<synchronous>, transform_indices = @transform_2, window_bounds = array<i64: 1, 10>}, {transform_indices = @transform_3, window_bounds = array<i64: 8, 10>}]} {
    %c0 = arith.constant 0 : index
    %c0_0 = arith.constant 0 : index
    %0 = vector.load %arg1[%c0, %c0_0] : memref<8x60xf32, #tpu.memory_space<vmem>>, vector<8x60xf32>
    %c0_1 = arith.constant 0 : index
    %c0_2 = arith.constant 0 : index
    %1 = vector.load %arg2[%c0_1, %c0_2] : memref<60x10xf32, #tpu.memory_space<vmem>>, vector<60x10xf32>
    %cst = arith.constant dense<0.000000e+00> : vector<8x10xf32>
    %2 = tpu.matmul %0, %1, %cst {dimension_numbers = #tpu.dot_dimension_numbers<[1], [0], [0], [1], [0, 0, 1, 1], [], []>, precision = #tpu.contract_precision<fp32>} : vector<8x60xf32>, vector<60x10xf32>, vector<8x10xf32> -> vector<8x10xf32>
    %c0_3 = arith.constant 0 : index
    %c0_4 = arith.constant 0 : index
    %3 = vector.load %arg3[%c0_3, %c0_4] : memref<1x10xf32, #tpu.memory_space<vmem>>, vector<1x10xf32>
    %4 = vector.broadcast %3 : vector<1x10xf32> to vector<8x10xf32>
    %5 = arith.addf %2, %4 : vector<8x10xf32>
    %c0_5 = arith.constant 0 : index
    %c0_6 = arith.constant 0 : index
    %6 = vector.load %arg4[%c0_5, %c0_6] : memref<8x10xf32, #tpu.memory_space<vmem>>, vector<8x10xf32>
    tpu.vector_store %arg4[%c0_5, %c0_6], %5 {strides = array<i32>} : memref<8x10xf32, #tpu.memory_space<vmem>>, vector<8x10xf32>,
    return
  }
  func.func @transform_0(%arg0: i32) -> (i32, i32) {
    %c0_i32 = arith.constant 0 : i32
    %c0_i32_0 = arith.constant 0 : i32
    return %arg0, %c0_i32 : i32, i32
  }
  func.func @transform_1(%arg0: i32) -> (i32, i32) {
    %c0_i32 = arith.constant 0 : i32
    %c0_i32_0 = arith.constant 0 : i32
    %c0_i32_1 = arith.constant 0 : i32
    return %c0_i32, %c0_i32_0 : i32, i32
  }
  func.func @transform_2(%arg0: i32) -> (i32, i32) {
    %c0_i32 = arith.constant 0 : i32
    %c0_i32_0 = arith.constant 0 : i32
    %c0_i32_1 = arith.constant 0 : i32
    return %c0_i32, %c0_i32_0 : i32, i32
  }
  func.func @transform_3(%arg0: i32) -> (i32, i32) {
    %c0_i32 = arith.constant 0 : i32
    %c0_i32_0 = arith.constant 0 : i32
    return %arg0, %c0_i32 : i32, i32
  }
}

</mosaic_0001>

<llo_original>
// kernel: tpu_custom_call.1
$region0: #{tpu_custom_call.1}
  #allocation0 [shape = 'u32[]', space=smem, size = 0x4, offset = 0x4, fixed_abs, tag = 'smem constant byte address 0x4 - core index']
  #allocation1 [shape = 'u32[144,128]{1,0:T(1,128)}', space=vmem, size = 0x12000, scoped, tag = 'internal scratch']
  %s0 = inlined_call_operand.hbm [shape: f32[8,60], index: 0, kind: input, shape index: {}]
  %s1 = inlined_call_operand.hbm [shape: f32[60,10], index: 1, kind: input, shape index: {}]
  %s2 = inlined_call_operand.hbm [shape: f32[1,10], index: 2, kind: input, shape index: {}]
  %s3 = inlined_call_operand.hbm [shape: f32[8,10], index: 3, kind: output, shape index: {}]
  %s4 = sld [smem:[#allocation0]]
  $region34: #{tpu_custom_call.1} parent=0
    _
  %s6 = ssub.s32 1, %s4
  %s7 = scalar_select 0, %s6, %s4
  $region1: #{tpu_custom_call.1} parent=0
    #allocation2 [shape = 'u8[4096]{0}', space=vmem, size = 0x1000, scoped, tag = 'input window, operand 0, single buffered']
    #allocation3 [shape = 's32[1]{0}', space=sflag, size = 0x4, scoped, tag = 'scoped memory for tpu_custom_call.1']
    #allocation4 [shape = 's32[1]{0}', space=sflag, size = 0x4, scoped, tag = 'scoped memory for tpu_custom_call.1']
    #allocation5 [shape = 'u8[32768]{0}', space=vmem, size = 0x8000, scoped, tag = 'input window, operand 1, single buffered']
    #allocation6 [shape = 's32[1]{0}', space=sflag, size = 0x4, scoped, tag = 'scoped memory for tpu_custom_call.1']
    #allocation7 [shape = 'u8[512]{0}', space=vmem, size = 0x400, scoped, tag = 'input window, operand 2, single buffered']
    #allocation8 [shape = 'u8[4096]{0}', space=vmem, size = 0x1000, scoped, tag = 'output window, operand 0, single buffered']
    %8 = vsyncpa [#allocation3], 0
    %9 = vsyncpa [#allocation6], 0
    %10 = vsyncpa [#allocation4], 0
    // Predicated region
    $region2: #{tpu_custom_call.1} parent=1 // pred_check
      _
    $region3: #{tpu_custom_call.1} parent=1 // pred_check_branch
      %12 = sbr.rel (0) target = $region5
    $region4: #{tpu_custom_call.1} parent=1 // pred_region
      %s14 = ssub.s32 128, 128
      %15 = vsyncadd [#allocation3], %s14
      %s17 = sshll.u32 [#allocation2], 4
      %s18 = int_to_ptr.vmem [resolvable:$true] %s17
      %20 = dma.hbm_to_vmem [thread:$0]  %s0, 128, %s18, [#allocation3]
    $region5: #{tpu_custom_call.1} parent=1 // pred_fallthru
      _
    // Predicated region
    $region6: #{tpu_custom_call.1} parent=1 // pred_check
      _
    $region7: #{tpu_custom_call.1} parent=1 // pred_check_branch
      %22 = sbr.rel (0) target = $region9
    $region8: #{tpu_custom_call.1} parent=1 // pred_region
      %s24 = ssub.s32 1024, 1024
      %25 = vsyncadd [#allocation6], %s24
      %s26 = sshll.u32 [#allocation5], 4
      %s27 = int_to_ptr.vmem [resolvable:$true] %s26
      %32 = dma.hbm_to_vmem [thread:$0]  %s1, 1024, %s27, [#allocation6], 128, 128, 8
    $region9: #{tpu_custom_call.1} parent=1 // pred_fallthru
      _
    // Predicated region
    $region10: #{tpu_custom_call.1} parent=1 // pred_check
      _
    $region11: #{tpu_custom_call.1} parent=1 // pred_check_branch
      %34 = sbr.rel (0) target = $region13
    $region12: #{tpu_custom_call.1} parent=1 // pred_region
      %s36 = ssub.s32 16, 16
      %37 = vsyncadd [#allocation6], %s36
      %s39 = sshll.u32 [#allocation7], 4
      %s40 = int_to_ptr.vmem [resolvable:$true] %s39
      %42 = dma.hbm_to_vmem [thread:$0]  %s2, 16, %s40, [#allocation6]
    $region13: #{tpu_custom_call.1} parent=1 // pred_fallthru
      _
    // Predicated region
    $region14: #{tpu_custom_call.1} parent=1 // pred_check
      _
    $region15: #{tpu_custom_call.1} parent=1 // pred_check_branch
      %44 = sbr.rel (0) target = $region17
    $region16: #{tpu_custom_call.1} parent=1 // pred_region
      %45 = dma.done [#allocation3], 128
    $region17: #{tpu_custom_call.1} parent=1 // pred_fallthru
      _
    // Predicated region
    $region18: #{tpu_custom_call.1} parent=1 // pred_check
      _
    $region19: #{tpu_custom_call.1} parent=1 // pred_check_branch
      %47 = sbr.rel (0) target = $region21
    $region20: #{tpu_custom_call.1} parent=1 // pred_region
      %48 = dma.done [#allocation6], 1024
    $region21: #{tpu_custom_call.1} parent=1 // pred_fallthru
      _
    // Predicated region
    $region22: #{tpu_custom_call.1} parent=1 // pred_check
      _
    $region23: #{tpu_custom_call.1} parent=1 // pred_check_branch
      %50 = sbr.rel (0) target = $region25
    $region24: #{tpu_custom_call.1} parent=1 // pred_region
      %51 = dma.done [#allocation6], 16
    $region25: #{tpu_custom_call.1} parent=1 // pred_fallthru
      _
    %v52 = vld [vmem:[#allocation2] sm:$0xff]
    %v53 = vld [vmem:[#allocation5] sm:$0xff]
    %v54 = vld [vmem:[#allocation5 + $0x8] sm:$0xff]
    %v55 = vld [vmem:[#allocation5 + $0x10] sm:$0xff]
    %v56 = vld [vmem:[#allocation5 + $0x18] sm:$0xff]
    %v57 = vld [vmem:[#allocation5 + $0x20] sm:$0xff]
    %v58 = vld [vmem:[#allocation5 + $0x28] sm:$0xff]
    %v59 = vld [vmem:[#allocation5 + $0x30] sm:$0xff]
    %v60 = vld [vmem:[#allocation5 + $0x38] sm:$0xf]
    %v61 = vld [vmem:[#allocation7] sm:$0x1]
    %v63 = vlaneseq
    %v64 = vshrl.u32 %v63, 7
    %v65 = vsub.s32 0, %v64
    %v66 = vrot.slane %v61, %v65
    %vm68 = vcmask 490496
    %v70 = vsel %vm68, %v52, 0
    %vm72 = vcmask 1043456
    %v74 = vsel %vm72, %v60, 0
    %76 = vmatprep.subr.mxu0 0.0
    %v77 = vand.u32 %v53, 4294901760
    %78 = vmatpush1.msra.mxu0 %v77
    %79 = vmatprep.subr.mxu0 0.0
    %v80 = vand.u32 %v54, 4294901760
    %81 = vmatpush1.msra.mxu0 %v80
    %82 = vmatprep.subr.mxu0 0.0
    %v83 = vand.u32 %v55, 4294901760
    %84 = vmatpush1.msra.mxu0 %v83
    %85 = vmatprep.subr.mxu0 0.0
    %v86 = vand.u32 %v56, 4294901760
    %87 = vmatpush1.msra.mxu0 %v86
    %88 = vmatprep.subr.mxu0 0.0
    %v89 = vand.u32 %v57, 4294901760
    %90 = vmatpush1.msra.mxu0 %v89
    %91 = vmatprep.subr.mxu0 0.0
    %v92 = vand.u32 %v58, 4294901760
    %93 = vmatpush1.msra.mxu0 %v92
    %94 = vmatprep.subr.mxu0 0.0
    %v95 = vand.u32 %v59, 4294901760
    %96 = vmatpush1.msra.mxu0 %v95
    %97 = vmatprep.subr.mxu0 0.0
    %v98 = vand.u32 %v74, 4294901760
    %99 = vmatpush1.msra.mxu0 %v98
    %100 = vmatprep.subr.mxu0 0.0
    %101 = vmatpush1.msra.mxu0 0.0
    %102 = vmatprep.subr.mxu0 0.0
    %103 = vmatpush1.msra.mxu0 0.0
    %104 = vmatprep.subr.mxu0 0.0
    %105 = vmatpush1.msra.mxu0 0.0
    %106 = vmatprep.subr.mxu0 0.0
    %107 = vmatpush1.msra.mxu0 0.0
    %108 = vmatprep.subr.mxu0 0.0
    %109 = vmatpush1.msra.mxu0 0.0
    %110 = vmatprep.subr.mxu0 0.0
    %111 = vmatpush1.msra.mxu0 0.0
    %112 = vmatprep.subr.mxu0 0.0
    %113 = vmatpush1.msra.mxu0 0.0
    %114 = vmatprep.subr.mxu0 0.0
    %115 = vmatpush1.msra.mxu0 0.0
    %116 = vmatprep.subr.mxu0 0.0
    %117 = vmatpush1.msra.mxu0 0.0
    %118 = vmatprep.subr.mxu0 0.0
    %119 = vmatpush1.msra.mxu0 0.0
    %120 = vmatprep.subr.mxu0 0.0
    %121 = vmatpush1.msra.mxu0 0.0
    %122 = vmatprep.subr.mxu0 0.0
    %123 = vmatpush1.msra.mxu0 0.0
    %124 = vmatprep.subr.mxu0 0.0
    %125 = vmatpush1.msra.mxu0 0.0
    %126 = vmatprep.subr.mxu0 0.0
    %127 = vmatpush1.msra.mxu0 0.0
    %128 = vmatprep.subr.mxu0 0.0
    %129 = vmatpush1.msra.mxu0 0.0
    %130 = vmatprep.subr.mxu0 0.0
    %131 = vmatpush1.msra.mxu0 0.0
    %132 = vmatprep.subr.mxu0 0.0
    %133 = vmatpush1.msra.mxu0 0.0
    %134 = vmatprep.subr.mxu0 0.0
    %135 = vmatpush1.msra.mxu0 0.0
    %136 = vmatprep.subr.mxu0 0.0
    %137 = vmatpush1.msra.mxu0 0.0
    %138 = vmatprep.subr.mxu0 0.0
    %139 = vmatpush1.msra.mxu0 0.0
    %140 = vmatprep.subr.mxu0 0.0
    %141 = vmatpush1.msra.mxu0 0.0
    %142 = vmatprep.subr.mxu0 0.0
    %143 = vmatpush1.msra.mxu0 0.0
    %144 = vmatprep.subr.mxu0 0.0
    %145 = vmatpush1.msra.mxu0 0.0
    %146 = vmatprep.subr.mxu0 0.0
    %147 = vmatpush1.msra.mxu0 0.0
    %148 = vmatprep.mubr.f32.mxu0 0.0
    %v149 = vand.u32 %v70, 4294901760
    %v150 = vsub.f32 %v70, %v149
    %v151 = vand.u32 %v150, 4294901760
    %v152 = vsub.f32 %v150, %v151
    %v153 = vand.u32 %v152, 4294901760
    %154 = vmatmul.mubr.f32.gmra.mrb[0].mxu0 %v153
    %v155 = vpop.f32.mrb[0].mxu0
    %v156 = vadd.f32 %v66, %v155
    %v157 = vpop.f32.mrb[0].mxu0
    %158 = vdwg.mxu0
    %159 = vmatprep.subr.mxu0 0.0
    %v160 = vand.u32 %v53, 4294901760
    %v161 = vsub.f32 %v53, %v160
    %v162 = vand.u32 %v161, 4294901760
    %v163 = vsub.f32 %v161, %v162
    %v164 = vand.u32 %v163, 4294901760
    %165 = vmatpush1.msra.mxu0 %v164
    %166 = vmatprep.subr.mxu0 0.0
    %v167 = vand.u32 %v54, 4294901760
    %v168 = vsub.f32 %v54, %v167
    %v169 = vand.u32 %v168, 4294901760
    %v170 = vsub.f32 %v168, %v169
    %v171 = vand.u32 %v170, 4294901760
    %172 = vmatpush1.msra.mxu0 %v171
    %173 = vmatprep.subr.mxu0 0.0
    %v174 = vand.u32 %v55, 4294901760
    %v175 = vsub.f32 %v55, %v174
    %v176 = vand.u32 %v175, 4294901760
    %v177 = vsub.f32 %v175, %v176
    %v178 = vand.u32 %v177, 4294901760
    %179 = vmatpush1.msra.mxu0 %v178
    %180 = vmatprep.subr.mxu0 0.0
    %v181 = vand.u32 %v56, 4294901760
    %v182 = vsub.f32 %v56, %v181
    %v183 = vand.u32 %v182, 4294901760
    %v184 = vsub.f32 %v182, %v183
    %v185 = vand.u32 %v184, 4294901760
    %186 = vmatpush1.msra.mxu0 %v185
    %187 = vmatprep.subr.mxu0 0.0
    %v188 = vand.u32 %v57, 4294901760
    %v189 = vsub.f32 %v57, %v188
    %v190 = vand.u32 %v189, 4294901760
    %v191 = vsub.f32 %v189, %v190
    %v192 = vand.u32 %v191, 4294901760
    %193 = vmatpush1.msra.mxu0 %v192
    %194 = vmatprep.subr.mxu0 0.0
    %v195 = vand.u32 %v58, 4294901760
    %v196 = vsub.f32 %v58, %v195
    %v197 = vand.u32 %v196, 4294901760
    %v198 = vsub.f32 %v196, %v197
    %v199 = vand.u32 %v198, 4294901760
    %200 = vmatpush1.msra.mxu0 %v199
    %201 = vmatprep.subr.mxu0 0.0
    %v202 = vand.u32 %v59, 4294901760
    %v203 = vsub.f32 %v59, %v202
    %v204 = vand.u32 %v203, 4294901760
    %v205 = vsub.f32 %v203, %v204
    %v206 = vand.u32 %v205, 4294901760
    %207 = vmatpush1.msra.mxu0 %v206
    %208 = vmatprep.subr.mxu0 0.0
    %v209 = vand.u32 %v74, 4294901760
    %v210 = vsub.f32 %v74, %v209
    %v211 = vand.u32 %v210, 4294901760
    %v212 = vsub.f32 %v210, %v211
    %v213 = vand.u32 %v212, 4294901760
    %214 = vmatpush1.msra.mxu0 %v213
    %215 = vmatprep.subr.mxu0 0.0
    %216 = vmatpush1.msra.mxu0 0.0
    %217 = vmatprep.subr.mxu0 0.0
    %218 = vmatpush1.msra.mxu0 0.0
    %219 = vmatprep.subr.mxu0 0.0
    %220 = vmatpush1.msra.mxu0 0.0
    %221 = vmatprep.subr.mxu0 0.0
    %222 = vmatpush1.msra.mxu0 0.0
    %223 = vmatprep.subr.mxu0 0.0
    %224 = vmatpush1.msra.mxu0 0.0
    %225 = vmatprep.subr.mxu0 0.0
    %226 = vmatpush1.msra.mxu0 0.0
    %227 = vmatprep.subr.mxu0 0.0
    %228 = vmatpush1.msra.mxu0 0.0
    %229 = vmatprep.subr.mxu0 0.0
    %230 = vmatpush1.msra.mxu0 0.0
    %231 = vmatprep.subr.mxu0 0.0
    %232 = vmatpush1.msra.mxu0 0.0
    %233 = vmatprep.subr.mxu0 0.0
    %234 = vmatpush1.msra.mxu0 0.0
    %235 = vmatprep.subr.mxu0 0.0
    %236 = vmatpush1.msra.mxu0 0.0
    %237 = vmatprep.subr.mxu0 0.0
    %238 = vmatpush1.msra.mxu0 0.0
    %239 = vmatprep.subr.mxu0 0.0
    %240 = vmatpush1.msra.mxu0 0.0
    %241 = vmatprep.subr.mxu0 0.0
    %242 = vmatpush1.msra.mxu0 0.0
    %243 = vmatprep.subr.mxu0 0.0
    %244 = vmatpush1.msra.mxu0 0.0
    %245 = vmatprep.subr.mxu0 0.0
    %246 = vmatpush1.msra.mxu0 0.0
    %247 = vmatprep.subr.mxu0 0.0
    %248 = vmatpush1.msra.mxu0 0.0
    %249 = vmatprep.subr.mxu0 0.0
    %250 = vmatpush1.msra.mxu0 0.0
    %251 = vmatprep.subr.mxu0 0.0
    %252 = vmatpush1.msra.mxu0 0.0
    %253 = vmatprep.subr.mxu0 0.0
    %254 = vmatpush1.msra.mxu0 0.0
    %255 = vmatprep.subr.mxu0 0.0
    %256 = vmatpush1.msra.mxu0 0.0
    %257 = vmatprep.subr.mxu0 0.0
    %258 = vmatpush1.msra.mxu0 0.0
    %259 = vmatprep.subr.mxu0 0.0
    %260 = vmatpush1.msra.mxu0 0.0
    %261 = vmatprep.subr.mxu0 0.0
    %262 = vmatpush1.msra.mxu0 0.0
    %263 = vmatprep.mubr.f32.mxu0 0.0
    %v264 = vand.u32 %v70, 4294901760
    %265 = vmatmul.mubr.f32.gmra.mrb[0].mxu0 %v264
    %v266 = vpop.f32.mrb[0].mxu0
    %v267 = vadd.f32 %v156, %v266
    %v268 = vpop.f32.mrb[0].mxu0
    %269 = vdwg.mxu0
    %270 = vmatprep.subr.mxu0 0.0
    %v271 = vand.u32 %v53, 4294901760
    %v272 = vsub.f32 %v53, %v271
    %273 = vmatpush1.msra.mxu0 %v272
    %274 = vmatprep.subr.mxu0 0.0
    %v275 = vand.u32 %v54, 4294901760
    %v276 = vsub.f32 %v54, %v275
    %277 = vmatpush1.msra.mxu0 %v276
    %278 = vmatprep.subr.mxu0 0.0
    %v279 = vand.u32 %v55, 4294901760
    %v280 = vsub.f32 %v55, %v279
    %281 = vmatpush1.msra.mxu0 %v280
    %282 = vmatprep.subr.mxu0 0.0
    %v283 = vand.u32 %v56, 4294901760
    %v284 = vsub.f32 %v56, %v283
    %285 = vmatpush1.msra.mxu0 %v284
    %286 = vmatprep.subr.mxu0 0.0
    %v287 = vand.u32 %v57, 4294901760
    %v288 = vsub.f32 %v57, %v287
    %289 = vmatpush1.msra.mxu0 %v288
    %290 = vmatprep.subr.mxu0 0.0
    %v291 = vand.u32 %v58, 4294901760
    %v292 = vsub.f32 %v58, %v291
    %293 = vmatpush1.msra.mxu0 %v292
    %294 = vmatprep.subr.mxu0 0.0
    %v295 = vand.u32 %v59, 4294901760
    %v296 = vsub.f32 %v59, %v295
    %297 = vmatpush1.msra.mxu0 %v296
    %298 = vmatprep.subr.mxu0 0.0
    %v299 = vand.u32 %v74, 4294901760
    %v300 = vsub.f32 %v74, %v299
    %301 = vmatpush1.msra.mxu0 %v300
    %302 = vmatprep.subr.mxu0 0.0
    %303 = vmatpush1.msra.mxu0 0.0
    %304 = vmatprep.subr.mxu0 0.0
    %305 = vmatpush1.msra.mxu0 0.0
    %306 = vmatprep.subr.mxu0 0.0
    %307 = vmatpush1.msra.mxu0 0.0
    %308 = vmatprep.subr.mxu0 0.0
    %309 = vmatpush1.msra.mxu0 0.0
    %310 = vmatprep.subr.mxu0 0.0
    %311 = vmatpush1.msra.mxu0 0.0
    %312 = vmatprep.subr.mxu0 0.0
    %313 = vmatpush1.msra.mxu0 0.0
    %314 = vmatprep.subr.mxu0 0.0
    %315 = vmatpush1.msra.mxu0 0.0
    %316 = vmatprep.subr.mxu0 0.0
    %317 = vmatpush1.msra.mxu0 0.0
    %318 = vmatprep.subr.mxu0 0.0
    %319 = vmatpush1.msra.mxu0 0.0
    %320 = vmatprep.subr.mxu0 0.0
    %321 = vmatpush1.msra.mxu0 0.0
    %322 = vmatprep.subr.mxu0 0.0
    %323 = vmatpush1.msra.mxu0 0.0
    %324 = vmatprep.subr.mxu0 0.0
    %325 = vmatpush1.msra.mxu0 0.0
    %326 = vmatprep.subr.mxu0 0.0
    %327 = vmatpush1.msra.mxu0 0.0
    %328 = vmatprep.subr.mxu0 0.0
    %329 = vmatpush1.msra.mxu0 0.0
    %330 = vmatprep.subr.mxu0 0.0
    %331 = vmatpush1.msra.mxu0 0.0
    %332 = vmatprep.subr.mxu0 0.0
    %333 = vmatpush1.msra.mxu0 0.0
    %334 = vmatprep.subr.mxu0 0.0
    %335 = vmatpush1.msra.mxu0 0.0
    %336 = vmatprep.subr.mxu0 0.0
    %337 = vmatpush1.msra.mxu0 0.0
    %338 = vmatprep.subr.mxu0 0.0
    %339 = vmatpush1.msra.mxu0 0.0
    %340 = vmatprep.subr.mxu0 0.0
    %341 = vmatpush1.msra.mxu0 0.0
    %342 = vmatprep.subr.mxu0 0.0
    %343 = vmatpush1.msra.mxu0 0.0
    %344 = vmatprep.subr.mxu0 0.0
    %345 = vmatpush1.msra.mxu0 0.0
    %346 = vmatprep.subr.mxu0 0.0
    %347 = vmatpush1.msra.mxu0 0.0
    %348 = vmatprep.subr.mxu0 0.0
    %349 = vmatpush1.msra.mxu0 0.0
    %350 = vmatprep.mubr.f32.mxu0 0.0
    %v351 = vand.u32 %v70, 4294901760
    %v352 = vsub.f32 %v70, %v351
    %353 = vmatmul.mubr.f32.gmra.mrb[0].mxu0 %v352
    %v354 = vpop.f32.mrb[0].mxu0
    %v355 = vadd.f32 %v267, %v354
    %v356 = vpop.f32.mrb[0].mxu0
    %357 = vdwg.mxu0
    %358 = vmatprep.subr.mxu0 0.0
    %v359 = vand.u32 %v53, 4294901760
    %360 = vmatpush1.msra.mxu0 %v359
    %361 = vmatprep.subr.mxu0 0.0
    %v362 = vand.u32 %v54, 4294901760
    %363 = vmatpush1.msra.mxu0 %v362
    %364 = vmatprep.subr.mxu0 0.0
    %v365 = vand.u32 %v55, 4294901760
    %366 = vmatpush1.msra.mxu0 %v365
    %367 = vmatprep.subr.mxu0 0.0
    %v368 = vand.u32 %v56, 4294901760
    %369 = vmatpush1.msra.mxu0 %v368
    %370 = vmatprep.subr.mxu0 0.0
    %v371 = vand.u32 %v57, 4294901760
    %372 = vmatpush1.msra.mxu0 %v371
    %373 = vmatprep.subr.mxu0 0.0
    %v374 = vand.u32 %v58, 4294901760
    %375 = vmatpush1.msra.mxu0 %v374
    %376 = vmatprep.subr.mxu0 0.0
    %v377 = vand.u32 %v59, 4294901760
    %378 = vmatpush1.msra.mxu0 %v377
    %379 = vmatprep.subr.mxu0 0.0
    %v380 = vand.u32 %v74, 4294901760
    %381 = vmatpush1.msra.mxu0 %v380
    %382 = vmatprep.subr.mxu0 0.0
    %383 = vmatpush1.msra.mxu0 0.0
    %384 = vmatprep.subr.mxu0 0.0
    %385 = vmatpush1.msra.mxu0 0.0
    %386 = vmatprep.subr.mxu0 0.0
    %387 = vmatpush1.msra.mxu0 0.0
    %388 = vmatprep.subr.mxu0 0.0
    %389 = vmatpush1.msra.mxu0 0.0
    %390 = vmatprep.subr.mxu0 0.0
    %391 = vmatpush1.msra.mxu0 0.0
    %392 = vmatprep.subr.mxu0 0.0
    %393 = vmatpush1.msra.mxu0 0.0
    %394 = vmatprep.subr.mxu0 0.0
    %395 = vmatpush1.msra.mxu0 0.0
    %396 = vmatprep.subr.mxu0 0.0
    %397 = vmatpush1.msra.mxu0 0.0
    %398 = vmatprep.subr.mxu0 0.0
    %399 = vmatpush1.msra.mxu0 0.0
    %400 = vmatprep.subr.mxu0 0.0
    %401 = vmatpush1.msra.mxu0 0.0
    %402 = vmatprep.subr.mxu0 0.0
    %403 = vmatpush1.msra.mxu0 0.0
    %404 = vmatprep.subr.mxu0 0.0
    %405 = vmatpush1.msra.mxu0 0.0
    %406 = vmatprep.subr.mxu0 0.0
    %407 = vmatpush1.msra.mxu0 0.0
    %408 = vmatprep.subr.mxu0 0.0
    %409 = vmatpush1.msra.mxu0 0.0
    %410 = vmatprep.subr.mxu0 0.0
    %411 = vmatpush1.msra.mxu0 0.0
    %412 = vmatprep.subr.mxu0 0.0
    %413 = vmatpush1.msra.mxu0 0.0
    %414 = vmatprep.subr.mxu0 0.0
    %415 = vmatpush1.msra.mxu0 0.0
    %416 = vmatprep.subr.mxu0 0.0
    %417 = vmatpush1.msra.mxu0 0.0
    %418 = vmatprep.subr.mxu0 0.0
    %419 = vmatpush1.msra.mxu0 0.0
    %420 = vmatprep.subr.mxu0 0.0
    %421 = vmatpush1.msra.mxu0 0.0
    %422 = vmatprep.subr.mxu0 0.0
    %423 = vmatpush1.msra.mxu0 0.0
    %424 = vmatprep.subr.mxu0 0.0
    %425 = vmatpush1.msra.mxu0 0.0
    %426 = vmatprep.subr.mxu0 0.0
    %427 = vmatpush1.msra.mxu0 0.0
    %428 = vmatprep.subr.mxu0 0.0
    %429 = vmatpush1.msra.mxu0 0.0
    %430 = vmatprep.mubr.f32.mxu0 0.0
    %v431 = vand.u32 %v70, 4294901760
    %v432 = vsub.f32 %v70, %v431
    %v433 = vand.u32 %v432, 4294901760
    %434 = vmatmul.mubr.f32.gmra.mrb[0].mxu0 %v433
    %v435 = vpop.f32.mrb[0].mxu0
    %v436 = vadd.f32 %v355, %v435
    %v437 = vpop.f32.mrb[0].mxu0
    %438 = vdwg.mxu0
    %439 = vmatprep.subr.mxu0 0.0
    %v440 = vand.u32 %v53, 4294901760
    %v441 = vsub.f32 %v53, %v440
    %v442 = vand.u32 %v441, 4294901760
    %443 = vmatpush1.msra.mxu0 %v442
    %444 = vmatprep.subr.mxu0 0.0
    %v445 = vand.u32 %v54, 4294901760
    %v446 = vsub.f32 %v54, %v445
    %v447 = vand.u32 %v446, 4294901760
    %448 = vmatpush1.msra.mxu0 %v447
    %449 = vmatprep.subr.mxu0 0.0
    %v450 = vand.u32 %v55, 4294901760
    %v451 = vsub.f32 %v55, %v450
    %v452 = vand.u32 %v451, 4294901760
    %453 = vmatpush1.msra.mxu0 %v452
    %454 = vmatprep.subr.mxu0 0.0
    %v455 = vand.u32 %v56, 4294901760
    %v456 = vsub.f32 %v56, %v455
    %v457 = vand.u32 %v456, 4294901760
    %458 = vmatpush1.msra.mxu0 %v457
    %459 = vmatprep.subr.mxu0 0.0
    %v460 = vand.u32 %v57, 4294901760
    %v461 = vsub.f32 %v57, %v460
    %v462 = vand.u32 %v461, 4294901760
    %463 = vmatpush1.msra.mxu0 %v462
    %464 = vmatprep.subr.mxu0 0.0
    %v465 = vand.u32 %v58, 4294901760
    %v466 = vsub.f32 %v58, %v465
    %v467 = vand.u32 %v466, 4294901760
    %468 = vmatpush1.msra.mxu0 %v467
    %469 = vmatprep.subr.mxu0 0.0
    %v470 = vand.u32 %v59, 4294901760
    %v471 = vsub.f32 %v59, %v470
    %v472 = vand.u32 %v471, 4294901760
    %473 = vmatpush1.msra.mxu0 %v472
    %474 = vmatprep.subr.mxu0 0.0
    %v475 = vand.u32 %v74, 4294901760
    %v476 = vsub.f32 %v74, %v475
    %v477 = vand.u32 %v476, 4294901760
    %478 = vmatpush1.msra.mxu0 %v477
    %479 = vmatprep.subr.mxu0 0.0
    %480 = vmatpush1.msra.mxu0 0.0
    %481 = vmatprep.subr.mxu0 0.0
    %482 = vmatpush1.msra.mxu0 0.0
    %483 = vmatprep.subr.mxu0 0.0
    %484 = vmatpush1.msra.mxu0 0.0
    %485 = vmatprep.subr.mxu0 0.0
    %486 = vmatpush1.msra.mxu0 0.0
    %487 = vmatprep.subr.mxu0 0.0
    %488 = vmatpush1.msra.mxu0 0.0
    %489 = vmatprep.subr.mxu0 0.0
    %490 = vmatpush1.msra.mxu0 0.0
    %491 = vmatprep.subr.mxu0 0.0
    %492 = vmatpush1.msra.mxu0 0.0
    %493 = vmatprep.subr.mxu0 0.0
    %494 = vmatpush1.msra.mxu0 0.0
    %495 = vmatprep.subr.mxu0 0.0
    %496 = vmatpush1.msra.mxu0 0.0
    %497 = vmatprep.subr.mxu0 0.0
    %498 = vmatpush1.msra.mxu0 0.0
    %499 = vmatprep.subr.mxu0 0.0
    %500 = vmatpush1.msra.mxu0 0.0
    %501 = vmatprep.subr.mxu0 0.0
    %502 = vmatpush1.msra.mxu0 0.0
    %503 = vmatprep.subr.mxu0 0.0
    %504 = vmatpush1.msra.mxu0 0.0
    %505 = vmatprep.subr.mxu0 0.0
    %506 = vmatpush1.msra.mxu0 0.0
    %507 = vmatprep.subr.mxu0 0.0
    %508 = vmatpush1.msra.mxu0 0.0
    %509 = vmatprep.subr.mxu0 0.0
    %510 = vmatpush1.msra.mxu0 0.0
    %511 = vmatprep.subr.mxu0 0.0
    %512 = vmatpush1.msra.mxu0 0.0
    %513 = vmatprep.subr.mxu0 0.0
    %514 = vmatpush1.msra.mxu0 0.0
    %515 = vmatprep.subr.mxu0 0.0
    %516 = vmatpush1.msra.mxu0 0.0
    %517 = vmatprep.subr.mxu0 0.0
    %518 = vmatpush1.msra.mxu0 0.0
    %519 = vmatprep.subr.mxu0 0.0
    %520 = vmatpush1.msra.mxu0 0.0
    %521 = vmatprep.subr.mxu0 0.0
    %522 = vmatpush1.msra.mxu0 0.0
    %523 = vmatprep.subr.mxu0 0.0
    %524 = vmatpush1.msra.mxu0 0.0
    %525 = vmatprep.subr.mxu0 0.0
    %526 = vmatpush1.msra.mxu0 0.0
    %527 = vmatprep.mubr.f32.mxu0 0.0
    %v528 = vand.u32 %v70, 4294901760
    %529 = vmatmul.mubr.f32.gmra.mrb[0].mxu0 %v528
    %v530 = vpop.f32.mrb[0].mxu0
    %v531 = vadd.f32 %v436, %v530
    %v532 = vpop.f32.mrb[0].mxu0
    %533 = vdwg.mxu0
    %534 = vmatprep.subr.mxu0 0.0
    %v535 = vand.u32 %v53, 4294901760
    %536 = vmatpush1.msra.mxu0 %v535
    %537 = vmatprep.subr.mxu0 0.0
    %v538 = vand.u32 %v54, 4294901760
    %539 = vmatpush1.msra.mxu0 %v538
    %540 = vmatprep.subr.mxu0 0.0
    %v541 = vand.u32 %v55, 4294901760
    %542 = vmatpush1.msra.mxu0 %v541
    %543 = vmatprep.subr.mxu0 0.0
    %v544 = vand.u32 %v56, 4294901760
    %545 = vmatpush1.msra.mxu0 %v544
    %546 = vmatprep.subr.mxu0 0.0
    %v547 = vand.u32 %v57, 4294901760
    %548 = vmatpush1.msra.mxu0 %v547
    %549 = vmatprep.subr.mxu0 0.0
    %v550 = vand.u32 %v58, 4294901760
    %551 = vmatpush1.msra.mxu0 %v550
    %552 = vmatprep.subr.mxu0 0.0
    %v553 = vand.u32 %v59, 4294901760
    %554 = vmatpush1.msra.mxu0 %v553
    %555 = vmatprep.subr.mxu0 0.0
    %v556 = vand.u32 %v74, 4294901760
    %557 = vmatpush1.msra.mxu0 %v556
    %558 = vmatprep.subr.mxu0 0.0
    %559 = vmatpush1.msra.mxu0 0.0
    %560 = vmatprep.subr.mxu0 0.0
    %561 = vmatpush1.msra.mxu0 0.0
    %562 = vmatprep.subr.mxu0 0.0
    %563 = vmatpush1.msra.mxu0 0.0
    %564 = vmatprep.subr.mxu0 0.0
    %565 = vmatpush1.msra.mxu0 0.0
    %566 = vmatprep.subr.mxu0 0.0
    %567 = vmatpush1.msra.mxu0 0.0
    %568 = vmatprep.subr.mxu0 0.0
    %569 = vmatpush1.msra.mxu0 0.0
    %570 = vmatprep.subr.mxu0 0.0
    %571 = vmatpush1.msra.mxu0 0.0
    %572 = vmatprep.subr.mxu0 0.0
    %573 = vmatpush1.msra.mxu0 0.0
    %574 = vmatprep.subr.mxu0 0.0
    %575 = vmatpush1.msra.mxu0 0.0
    %576 = vmatprep.subr.mxu0 0.0
    %577 = vmatpush1.msra.mxu0 0.0
    %578 = vmatprep.subr.mxu0 0.0
    %579 = vmatpush1.msra.mxu0 0.0
    %580 = vmatprep.subr.mxu0 0.0
    %581 = vmatpush1.msra.mxu0 0.0
    %582 = vmatprep.subr.mxu0 0.0
    %583 = vmatpush1.msra.mxu0 0.0
    %584 = vmatprep.subr.mxu0 0.0
    %585 = vmatpush1.msra.mxu0 0.0
    %586 = vmatprep.subr.mxu0 0.0
    %587 = vmatpush1.msra.mxu0 0.0
    %588 = vmatprep.subr.mxu0 0.0
    %589 = vmatpush1.msra.mxu0 0.0
    %590 = vmatprep.subr.mxu0 0.0
    %591 = vmatpush1.msra.mxu0 0.0
    %592 = vmatprep.subr.mxu0 0.0
    %593 = vmatpush1.msra.mxu0 0.0
    %594 = vmatprep.subr.mxu0 0.0
    %595 = vmatpush1.msra.mxu0 0.0
    %596 = vmatprep.subr.mxu0 0.0
    %597 = vmatpush1.msra.mxu0 0.0
    %598 = vmatprep.subr.mxu0 0.0
    %599 = vmatpush1.msra.mxu0 0.0
    %600 = vmatprep.subr.mxu0 0.0
    %601 = vmatpush1.msra.mxu0 0.0
    %602 = vmatprep.subr.mxu0 0.0
    %603 = vmatpush1.msra.mxu0 0.0
    %604 = vmatprep.subr.mxu0 0.0
    %605 = vmatpush1.msra.mxu0 0.0
    %606 = vmatprep.mubr.f32.mxu0 0.0
    %v607 = vand.u32 %v70, 4294901760
    %608 = vmatmul.mubr.f32.gmra.mrb[0].mxu0 %v607
    %v609 = vpop.f32.mrb[0].mxu0
    %v610 = vadd.f32 %v531, %v609
    %v611 = vpop.f32.mrb[0].mxu0
    %612 = vdwg.mxu0
    %vm613 = vcmask 80896
    %614 = vst.msk [vmem:[#allocation8] sm:$0xff] %vm613, %v610
    // Predicated region
    $region26: #{tpu_custom_call.1} parent=1 // pred_check
      _
    $region27: #{tpu_custom_call.1} parent=1 // pred_check_branch
      %616 = sbr.rel (0) target = $region29
    $region28: #{tpu_custom_call.1} parent=1 // pred_region
      %s618 = ssub.s32 128, 128
      %619 = vsyncadd [#allocation4], %s618
      %s621 = sshll.u32 [#allocation8], 4
      %s622 = int_to_ptr.vmem [resolvable:$true] %s621
      %624 = dma.vmem_to_hbm [thread:$0]  %s622, 128, %s3, [#allocation4]
    $region29: #{tpu_custom_call.1} parent=1 // pred_fallthru
      _
    // Predicated region
    $region30: #{tpu_custom_call.1} parent=1 // pred_check
      _
    $region31: #{tpu_custom_call.1} parent=1 // pred_check_branch
      %626 = sbr.rel (0) target = $region33
    $region32: #{tpu_custom_call.1} parent=1 // pred_region
      %627 = dma.done [#allocation4], 128
    $region33: #{tpu_custom_call.1} parent=1 // pred_fallthru
      _
    %628 = vsyncpa [#allocation3], 1
    %629 = vsyncpa [#allocation6], 1
    %630 = vsyncpa [#allocation4], 1

</llo_original>
